<compile_context>
chip_gen: v5e
topology: v5e:2x2
jax: 0.10.0
libtpu: 0.0.40
codegen_flags: <defaults>
</compile_context>

<pallas_src>
import functools

import jax
import jax.numpy as jnp
from jax.experimental import pallas as pl
from jax.experimental.pallas import tpu as pltpu


_SUBLANE = 8
_ONEHOT_MAX_VOCAB = 4096                      # keep one-hot / MXU work per token cheap
_ONEHOT_VCHUNK = 512                          # bound the (B, vchunk) one-hot intermediate
_RESIDENT_VMEM_BUDGET = 48 * 1024 * 1024      # safe on v7x (64 MiB) and v5e/v6e (128 MiB)


def _round_up(x, m):
    return (x + m - 1) // m * m


def _resident_gather_kernel(idx_ref, table_ref, out_ref, *, vchunk, precision):
    """Table fully VMEM-resident; gather a (B, D) tile per grid step via one-hot MXU matmuls.

    The vocab axis is split into static chunks of `vchunk` rows so the (B, vchunk)
    one-hot selector stays small; small vocabs take a single iteration.
    """
    idx = idx_ref[...]                                    # (B, 1) int32, rows on sublanes
    b = idx.shape[0]
    v = table_ref.shape[0]

    acc = None
    for base in range(0, v, vchunk):                      # static unroll (<= a few chunks)
        size = min(vchunk, v - base)
        tab = table_ref[base:base + size, :]              # static slice -> cheap ref view
        # (B, size) one-hot: vocab index varies along lanes, compared to (B, 1) indices.
        iota_v = jax.lax.broadcasted_iota(jnp.int32, (b, size), 1) + base
        onehot = (iota_v == idx).astype(tab.dtype)
        part = jnp.dot(onehot, tab,
                       preferred_element_type=jnp.float32,
                       precision=precision)
        acc = part if acc is None else acc + part
    out_ref[...] = acc.astype(out_ref.dtype)


def _row_gather_kernel(idx_ref, table_ref, out_ref):
    # idx_ref lives in SMEM (scalar prefetch) and is consumed by the index_maps;
    # the body just copies the selected (1, D) row tile to the output tile.
    del idx_ref
    out_ref[...] = table_ref[...]


def _resident_lookup(table, flat_idx, block_b, vchunk):
    """Gather with the whole embedding table resident in VMEM."""
    V, D = table.shape
    n = flat_idx.shape[0]
    n_pad = _round_up(max(n, 1), block_b)
    idx = jnp.zeros((n_pad,), jnp.int32).at[:n].set(flat_idx)
    idx2d = idx.reshape(n_pad, 1)
    num_blocks = n_pad // block_b

    itemsize = table.dtype.itemsize
    vmem_needed = (V * D * itemsize                # resident table (single buffer)
                   + 2 * block_b * D * itemsize    # double-buffered output tiles
                   + 2 * block_b * 4               # double-buffered index tiles
                   + block_b * min(vchunk, V) * 4  # one-hot chunk intermediate
                   + (1 << 20))                    # slack
    vmem_limit = int(min(_RESIDENT_VMEM_BUDGET,
                         max(32 * 1024 * 1024, 2 * vmem_needed)))

    # f32 tables need the HIGHEST-precision (multi-pass) MXU contraction to keep the
    # gathered rows bit-exact; bf16 rows are already exact under the default pass.
    precision = (jax.lax.Precision.HIGHEST
                 if table.dtype == jnp.float32 else jax.lax.Precision.DEFAULT)

    kernel = functools.partial(_resident_gather_kernel,
                               vchunk=min(vchunk, V), precision=precision)

    out = pl.pallas_call(
        kernel,
        out_shape=jax.ShapeDtypeStruct((n_pad, D), table.dtype),
        grid_spec=pltpu.PrefetchScalarGridSpec(
            num_scalar_prefetch=0,
            grid=(num_blocks,),
            in_specs=[
                # (B, 1) index tile per step, pipelined like a normal input.
                pl.BlockSpec((block_b, 1), lambda i: (i, 0)),
                # Whole table with a constant index_map: DMA'd once, stays resident.
                pl.BlockSpec((V, D), lambda i: (0, 0)),
            ],
            out_specs=pl.BlockSpec((block_b, D), lambda i: (i, 0)),
        ),
        compiler_params=pltpu.CompilerParams(
            dimension_semantics=("parallel",),   # independent token blocks (v7x megacore)
            vmem_limit_bytes=vmem_limit,
        ),
    )(idx2d, table)
    return out[:n]


def _row_gather_lookup(table, flat_idx):
    """Fallback for tables that do not fit VMEM: data-dependent per-row gather."""
    V, D = table.shape
    n = flat_idx.shape[0]
    # TODO(synk): for very large tables / token counts, a batched manual-DMA gather
    # (memory_space=pl.ANY table + multi-row make_async_copy double-buffering, chunked
    # index prefetch) would hide per-row HBM latency better than this pipelined gather.
    out = pl.pallas_call(
        _row_gather_kernel,
        out_shape=jax.ShapeDtypeStruct((n, D), table.dtype),
        grid_spec=pltpu.PrefetchScalarGridSpec(
            num_scalar_prefetch=1,               # flat_idx -> SMEM, feeds the index_maps
            grid=(n,),
            in_specs=[
                pl.BlockSpec((1, D), lambda i, idx: (idx[i], 0),
                             pipeline_mode=pl.Buffered(4)),
            ],
            out_specs=pl.BlockSpec((1, D), lambda i, idx: (i, 0)),
        ),
        compiler_params=pltpu.CompilerParams(
            dimension_semantics=("parallel",),
        ),
    )(flat_idx, table)
    return out


def manifold_embedding_lookup(table, x, *, block_b=512):
    """Pallas equivalent of ManifoldEmbedding.forward: embeddings[x]."""
    V, D = table.shape
    # Graceful OOB handling: clamp indices instead of letting a bad DMA source fault.
    flat_idx = jnp.clip(x.reshape(-1).astype(jnp.int32), 0, V - 1)
    n = flat_idx.shape[0]

    # Sublane-aligned batch of indices per grid step; don't over-pad tiny problems.
    b = min(block_b, _round_up(max(n, 1), _SUBLANE))
    b = _round_up(b, _SUBLANE)

    vchunk = min(_ONEHOT_VCHUNK, V)
    itemsize = table.dtype.itemsize
    resident_bytes = (V * D * itemsize + 2 * b * D * itemsize + 2 * b * 4
                      + b * vchunk * 4 + (1 << 20))

    if V <= _ONEHOT_MAX_VOCAB and resident_bytes <= _RESIDENT_VMEM_BUDGET:
        out = _resident_lookup(table, flat_idx, b, vchunk)
    else:
        out = _row_gather_lookup(table, flat_idx)
    return out.reshape(x.shape + (D,))


def init_manifold_embeddings(key, vocab_size, embed_dim):
    # ManifoldEmbedding.__init__ draws a normal sample around the manifold origin
    # (Euclidean origin = 0, std = 1.0) and projects onto the manifold.
    # TODO(synk): non-Euclidean manifold projection (proj_) has no clean Pallas
    # equivalent here; for the Euclidean case projection is the identity.
    return jax.random.normal(key, (vocab_size, embed_dim), dtype=jnp.float32)


if __name__ == "__main__":
    vocab_size = 32
    embed_dim = 128

    key = jax.random.PRNGKey(0)
    k_table, k_idx = jax.random.split(key)

    table = init_manifold_embeddings(k_table, vocab_size, embed_dim)
    x = jax.random.randint(k_idx, (2, 8), minval=0, maxval=vocab_size, dtype=jnp.int32)

    out = manifold_embedding_lookup(table, x)
    out = jax.block_until_ready(out)

    # correctness check against plain JAX gather
    ref = jnp.take(table, x, axis=0)
    assert out.shape == (2, 8, embed_dim)
    assert jnp.allclose(out, ref, rtol=1e-5, atol=1e-5), "Pallas gather mismatch vs reference"

    print("KERNEL_OK")
</pallas_src>

<mosaic_0001>
module attributes {stable_mosaic.version = 11 : i64} {
  func.func @_resident_gather_kernel(%arg0: i32, %arg1: memref<16x1xi32, #tpu.memory_space<vmem>>, %arg2: memref<32x128xf32, #tpu.memory_space<vmem>>, %arg3: memref<16x128xf32, #tpu.memory_space<vmem>>) attributes {dimension_semantics = [#tpu.dimension_semantics<parallel>], iteration_bounds = array<i64: 1>, scalar_prefetch = 0 : i64, scratch_operands = 0 : i64, tpu.core_type = #tpu.core_type<tc>, window_params = [{transform_indices = @transform_0, window_bounds = array<i64: 16, 1>}, {pipeline_mode = #tpu.pipeline_mode<synchronous>, transform_indices = @transform_1, window_bounds = array<i64: 32, 128>}, {transform_indices = @transform_2, window_bounds = array<i64: 16, 128>}]} {
    %c0 = arith.constant 0 : index
    %c0_0 = arith.constant 0 : index
    %0 = vector.load %arg1[%c0, %c0_0] : memref<16x1xi32, #tpu.memory_space<vmem>>, vector<16x1xi32>
    %c0_1 = arith.constant 0 : index
    %c0_2 = arith.constant 0 : index
    %1 = vector.load %arg2[%c0_1, %c0_2] : memref<32x128xf32, #tpu.memory_space<vmem>>, vector<32x128xf32>
    %2 = tpu.iota {dimensions = array<i32: 1>} : vector<16x32xi32>
    %c0_i32 = arith.constant 0 : i32
    %3 = vector.broadcast %c0_i32 : i32 to vector<16x32xi32>
    %4 = arith.addi %2, %3 : vector<16x32xi32>
    %5 = vector.broadcast %0 : vector<16x1xi32> to vector<16x32xi32>
    %6 = arith.cmpi eq, %4, %5 : vector<16x32xi32>
    %7 = arith.extui %6 : vector<16x32xi1> to vector<16x32xi32>
    %8 = arith.sitofp %7 : vector<16x32xi32> to vector<16x32xf32>
    %cst = arith.constant dense<0.000000e+00> : vector<16x128xf32>
    %9 = tpu.matmul %8, %1, %cst {dimension_numbers = #tpu.dot_dimension_numbers<[1], [0], [0], [1], [0, 0, 1, 1], [], []>, precision = #tpu.contract_precision<fp32>} : vector<16x32xf32>, vector<32x128xf32>, vector<16x128xf32> -> vector<16x128xf32>
    %c0_3 = arith.constant 0 : index
    %c0_4 = arith.constant 0 : index
    %10 = vector.load %arg3[%c0_3, %c0_4] : memref<16x128xf32, #tpu.memory_space<vmem>>, vector<16x128xf32>
    tpu.vector_store %arg3[%c0_3, %c0_4], %9 {strides = array<i32>} : memref<16x128xf32, #tpu.memory_space<vmem>>, vector<16x128xf32>,
    return
  }
  func.func @transform_0(%arg0: i32) -> (i32, i32) {
    %c0_i32 = arith.constant 0 : i32
    %c0_i32_0 = arith.constant 0 : i32
    return %arg0, %c0_i32 : i32, i32
  }
  func.func @transform_1(%arg0: i32) -> (i32, i32) {
    %c0_i32 = arith.constant 0 : i32
    %c0_i32_0 = arith.constant 0 : i32
    %c0_i32_1 = arith.constant 0 : i32
    return %c0_i32, %c0_i32_0 : i32, i32
  }
  func.func @transform_2(%arg0: i32) -> (i32, i32) {
    %c0_i32 = arith.constant 0 : i32
    %c0_i32_0 = arith.constant 0 : i32
    return %arg0, %c0_i32 : i32, i32
  }
}

</mosaic_0001>

<llo_original>
// kernel: tpu_custom_call.1
$region0: #{tpu_custom_call.1}
  #allocation0 [shape = 'u32[]', space=smem, size = 0x4, offset = 0x4, fixed_abs, tag = 'smem constant byte address 0x4 - core index']
  #allocation1 [shape = 'u32[72,128]{1,0:T(1,128)}', space=vmem, size = 0x9000, scoped, tag = 'internal scratch']
  %s0 = inlined_call_operand.vmem [shape: s32[16,1], index: 0, kind: input, shape index: {}]
  %s1 = inlined_call_operand.hbm [shape: f32[32,128], index: 1, kind: input, shape index: {}]
  %s2 = inlined_call_operand.hbm [shape: f32[16,128], index: 2, kind: output, shape index: {}]
  %s3 = sld [smem:[#allocation0]]
  $region22: #{tpu_custom_call.1} parent=0
    _
  %s5 = ssub.s32 1, %s3
  %s6 = scalar_select 0, %s5, %s3
  $region1: #{tpu_custom_call.1} parent=0
    #allocation2 [shape = 'u8[16384]{0}', space=vmem, size = 0x4000, scoped, tag = 'input window, operand 1, single buffered']
    #allocation3 [shape = 's32[1]{0}', space=sflag, size = 0x4, scoped, tag = 'scoped memory for tpu_custom_call.1']
    #allocation4 [shape = 's32[1]{0}', space=sflag, size = 0x4, scoped, tag = 'scoped memory for tpu_custom_call.1']
    #allocation5 [shape = 'u8[8192]{0}', space=vmem, size = 0x2000, scoped, tag = 'output window, operand 0, single buffered']
    %7 = vsyncpa [#allocation3], 0
    %8 = vsyncpa [#allocation4], 0
    // Predicated region
    $region2: #{tpu_custom_call.1} parent=1 // pred_check
      _
    $region3: #{tpu_custom_call.1} parent=1 // pred_check_branch
      %10 = sbr.rel (0) target = $region5
    $region4: #{tpu_custom_call.1} parent=1 // pred_region
      _
    $region5: #{tpu_custom_call.1} parent=1 // pred_fallthru
      _
    // Predicated region
    $region6: #{tpu_custom_call.1} parent=1 // pred_check
      _
    $region7: #{tpu_custom_call.1} parent=1 // pred_check_branch
      %12 = sbr.rel (0) target = $region9
    $region8: #{tpu_custom_call.1} parent=1 // pred_region
      %14 = vsyncadd [#allocation3], 0
      %s15 = sshll.u32 %s1, 4
      %s16 = int_to_ptr.hbm [resolvable:$true] %s15
      %s17 = sshll.u32 [#allocation2], 4
      %s18 = int_to_ptr.vmem [resolvable:$true] %s17
      %23 = dma.hbm_to_vmem [thread:$0]  %s16, 512, %s18, [#allocation3], 128, 128, 8
    $region9: #{tpu_custom_call.1} parent=1 // pred_fallthru
      _
    // Predicated region
    $region10: #{tpu_custom_call.1} parent=1 // pred_check
      _
    $region11: #{tpu_custom_call.1} parent=1 // pred_check_branch
      %25 = sbr.rel (0) target = $region13
    $region12: #{tpu_custom_call.1} parent=1 // pred_region
      %27 = dma.done [#allocation3], 512
    $region13: #{tpu_custom_call.1} parent=1 // pred_fallthru
      _
    %v28 = vld [vmem:[%s0] sm:$0xff]
    %v29 = vld [vmem:[%s0 + $0x8] sm:$0xff]
    %v30 = vld [vmem:[#allocation2] sm:$0xff]
    %v31 = vld [vmem:[#allocation2 + $0x8] sm:$0xff]
    %v32 = vld [vmem:[#allocation2 + $0x10] sm:$0xff]
    %v33 = vld [vmem:[#allocation2 + $0x18] sm:$0xff]
    %v34 = vlaneseq
    %v35 = vand.u32 %v34, 127
    %36 = vset.pattern.permute.xlu0 0
    %37 = vperm.xlu0 %36, %v28
    %v38 = vpop.permute.xlu0 %37
    %39 = vset.pattern.permute.xlu0 0
    %40 = vperm.xlu0 %39, %v29
    %v41 = vpop.permute.xlu0 %40
    %vm42 = vcmp.eq.s32.totalorder %v35, %v38
    %vm43 = vcmp.eq.s32.totalorder %v35, %v41
    %v44 = vsel %vm42, 1, 0
    %v45 = vsel %vm43, 1, 0
    %v46 = vcvt.s32.f32 %v44
    %v47 = vcvt.s32.f32 %v45
    %vm48 = vcmask 261120
    %v50 = vsel %vm48, %v46, 0
    %v53 = vsel %vm48, %v47, 0
    %55 = vmatpush.msra.mxu0 0.0
    %56 = vmatpush.msra.mxu0 0.0
    %57 = vmatpush.msra.mxu0 0.0
    %58 = vmatpush.msra.mxu0 0.0
    %59 = vmatpush.msra.mxu0 0.0
    %60 = vmatpush.msra.mxu0 0.0
    %61 = vmatpush.msra.mxu0 0.0
    %62 = vmatpush.msra.mxu0 0.0
    %63 = vmatpush.msra.mxu0 0.0
    %64 = vmatpush.msra.mxu0 0.0
    %65 = vmatpush.msra.mxu0 0.0
    %66 = vmatpush.msra.mxu0 0.0
    %v67 = vand.u32 %v33, 4294901760
    %68 = vmatpush.msra.mxu0 %v67
    %v69 = vand.u32 %v32, 4294901760
    %70 = vmatpush.msra.mxu0 %v69
    %v71 = vand.u32 %v31, 4294901760
    %72 = vmatpush.msra.mxu0 %v71
    %v73 = vand.u32 %v30, 4294901760
    %74 = vmatpush.msra.mxu0 %v73
    %v75 = vand.u32 %v50, 4294901760
    %v76 = vsub.f32 %v50, %v75
    %v77 = vand.u32 %v76, 4294901760
    %v78 = vsub.f32 %v76, %v77
    %v79 = vand.u32 %v78, 4294901760
    %80 = vmatmul.f32.gmra.mxu0 %v79
    %v81 = vpop.f32.mrf.mxu0
    %v82 = vadd.f32 0.0, %v81
    %v83 = vand.u32 %v53, 4294901760
    %v84 = vsub.f32 %v53, %v83
    %v85 = vand.u32 %v84, 4294901760
    %v86 = vsub.f32 %v84, %v85
    %v87 = vand.u32 %v86, 4294901760
    %88 = vmatmul.f32.gmra.mxu0 %v87
    %v89 = vpop.f32.mrf.mxu0
    %v90 = vadd.f32 0.0, %v89
    %91 = vdwg.mxu0
    %92 = vmatpush.msra.mxu0 0.0
    %93 = vmatpush.msra.mxu0 0.0
    %94 = vmatpush.msra.mxu0 0.0
    %95 = vmatpush.msra.mxu0 0.0
    %96 = vmatpush.msra.mxu0 0.0
    %97 = vmatpush.msra.mxu0 0.0
    %98 = vmatpush.msra.mxu0 0.0
    %99 = vmatpush.msra.mxu0 0.0
    %100 = vmatpush.msra.mxu0 0.0
    %101 = vmatpush.msra.mxu0 0.0
    %102 = vmatpush.msra.mxu0 0.0
    %103 = vmatpush.msra.mxu0 0.0
    %v104 = vand.u32 %v33, 4294901760
    %v105 = vsub.f32 %v33, %v104
    %v106 = vand.u32 %v105, 4294901760
    %v107 = vsub.f32 %v105, %v106
    %v108 = vand.u32 %v107, 4294901760
    %109 = vmatpush.msra.mxu0 %v108
    %v110 = vand.u32 %v32, 4294901760
    %v111 = vsub.f32 %v32, %v110
    %v112 = vand.u32 %v111, 4294901760
    %v113 = vsub.f32 %v111, %v112
    %v114 = vand.u32 %v113, 4294901760
    %115 = vmatpush.msra.mxu0 %v114
    %v116 = vand.u32 %v31, 4294901760
    %v117 = vsub.f32 %v31, %v116
    %v118 = vand.u32 %v117, 4294901760
    %v119 = vsub.f32 %v117, %v118
    %v120 = vand.u32 %v119, 4294901760
    %121 = vmatpush.msra.mxu0 %v120
    %v122 = vand.u32 %v30, 4294901760
    %v123 = vsub.f32 %v30, %v122
    %v124 = vand.u32 %v123, 4294901760
    %v125 = vsub.f32 %v123, %v124
    %v126 = vand.u32 %v125, 4294901760
    %127 = vmatpush.msra.mxu0 %v126
    %v128 = vand.u32 %v50, 4294901760
    %129 = vmatmul.f32.gmra.mxu0 %v128
    %v130 = vpop.f32.mrf.mxu0
    %v131 = vadd.f32 %v82, %v130
    %v132 = vand.u32 %v53, 4294901760
    %133 = vmatmul.f32.gmra.mxu0 %v132
    %v134 = vpop.f32.mrf.mxu0
    %v135 = vadd.f32 %v90, %v134
    %136 = vdwg.mxu0
    %137 = vmatpush.msra.mxu0 0.0
    %138 = vmatpush.msra.mxu0 0.0
    %139 = vmatpush.msra.mxu0 0.0
    %140 = vmatpush.msra.mxu0 0.0
    %141 = vmatpush.msra.mxu0 0.0
    %142 = vmatpush.msra.mxu0 0.0
    %143 = vmatpush.msra.mxu0 0.0
    %144 = vmatpush.msra.mxu0 0.0
    %145 = vmatpush.msra.mxu0 0.0
    %146 = vmatpush.msra.mxu0 0.0
    %147 = vmatpush.msra.mxu0 0.0
    %148 = vmatpush.msra.mxu0 0.0
    %v149 = vand.u32 %v33, 4294901760
    %v150 = vsub.f32 %v33, %v149
    %151 = vmatpush.msra.mxu0 %v150
    %v152 = vand.u32 %v32, 4294901760
    %v153 = vsub.f32 %v32, %v152
    %154 = vmatpush.msra.mxu0 %v153
    %v155 = vand.u32 %v31, 4294901760
    %v156 = vsub.f32 %v31, %v155
    %157 = vmatpush.msra.mxu0 %v156
    %v158 = vand.u32 %v30, 4294901760
    %v159 = vsub.f32 %v30, %v158
    %160 = vmatpush.msra.mxu0 %v159
    %v161 = vand.u32 %v50, 4294901760
    %v162 = vsub.f32 %v50, %v161
    %163 = vmatmul.f32.gmra.mxu0 %v162
    %v164 = vpop.f32.mrf.mxu0
    %v165 = vadd.f32 %v131, %v164
    %v166 = vand.u32 %v53, 4294901760
    %v167 = vsub.f32 %v53, %v166
    %168 = vmatmul.f32.gmra.mxu0 %v167
    %v169 = vpop.f32.mrf.mxu0
    %v170 = vadd.f32 %v135, %v169
    %171 = vdwg.mxu0
    %172 = vmatpush.msra.mxu0 0.0
    %173 = vmatpush.msra.mxu0 0.0
    %174 = vmatpush.msra.mxu0 0.0
    %175 = vmatpush.msra.mxu0 0.0
    %176 = vmatpush.msra.mxu0 0.0
    %177 = vmatpush.msra.mxu0 0.0
    %178 = vmatpush.msra.mxu0 0.0
    %179 = vmatpush.msra.mxu0 0.0
    %180 = vmatpush.msra.mxu0 0.0
    %181 = vmatpush.msra.mxu0 0.0
    %182 = vmatpush.msra.mxu0 0.0
    %183 = vmatpush.msra.mxu0 0.0
    %v184 = vand.u32 %v33, 4294901760
    %185 = vmatpush.msra.mxu0 %v184
    %v186 = vand.u32 %v32, 4294901760
    %187 = vmatpush.msra.mxu0 %v186
    %v188 = vand.u32 %v31, 4294901760
    %189 = vmatpush.msra.mxu0 %v188
    %v190 = vand.u32 %v30, 4294901760
    %191 = vmatpush.msra.mxu0 %v190
    %v192 = vand.u32 %v50, 4294901760
    %v193 = vsub.f32 %v50, %v192
    %v194 = vand.u32 %v193, 4294901760
    %195 = vmatmul.f32.gmra.mxu0 %v194
    %v196 = vpop.f32.mrf.mxu0
    %v197 = vadd.f32 %v165, %v196
    %v198 = vand.u32 %v53, 4294901760
    %v199 = vsub.f32 %v53, %v198
    %v200 = vand.u32 %v199, 4294901760
    %201 = vmatmul.f32.gmra.mxu0 %v200
    %v202 = vpop.f32.mrf.mxu0
    %v203 = vadd.f32 %v170, %v202
    %204 = vdwg.mxu0
    %205 = vmatpush.msra.mxu0 0.0
    %206 = vmatpush.msra.mxu0 0.0
    %207 = vmatpush.msra.mxu0 0.0
    %208 = vmatpush.msra.mxu0 0.0
    %209 = vmatpush.msra.mxu0 0.0
    %210 = vmatpush.msra.mxu0 0.0
    %211 = vmatpush.msra.mxu0 0.0
    %212 = vmatpush.msra.mxu0 0.0
    %213 = vmatpush.msra.mxu0 0.0
    %214 = vmatpush.msra.mxu0 0.0
    %215 = vmatpush.msra.mxu0 0.0
    %216 = vmatpush.msra.mxu0 0.0
    %v217 = vand.u32 %v33, 4294901760
    %v218 = vsub.f32 %v33, %v217
    %v219 = vand.u32 %v218, 4294901760
    %220 = vmatpush.msra.mxu0 %v219
    %v221 = vand.u32 %v32, 4294901760
    %v222 = vsub.f32 %v32, %v221
    %v223 = vand.u32 %v222, 4294901760
    %224 = vmatpush.msra.mxu0 %v223
    %v225 = vand.u32 %v31, 4294901760
    %v226 = vsub.f32 %v31, %v225
    %v227 = vand.u32 %v226, 4294901760
    %228 = vmatpush.msra.mxu0 %v227
    %v229 = vand.u32 %v30, 4294901760
    %v230 = vsub.f32 %v30, %v229
    %v231 = vand.u32 %v230, 4294901760
    %232 = vmatpush.msra.mxu0 %v231
    %v233 = vand.u32 %v50, 4294901760
    %234 = vmatmul.f32.gmra.mxu0 %v233
    %v235 = vpop.f32.mrf.mxu0
    %v236 = vadd.f32 %v197, %v235
    %v237 = vand.u32 %v53, 4294901760
    %238 = vmatmul.f32.gmra.mxu0 %v237
    %v239 = vpop.f32.mrf.mxu0
    %v240 = vadd.f32 %v203, %v239
    %241 = vdwg.mxu0
    %242 = vmatpush.msra.mxu0 0.0
    %243 = vmatpush.msra.mxu0 0.0
    %244 = vmatpush.msra.mxu0 0.0
    %245 = vmatpush.msra.mxu0 0.0
    %246 = vmatpush.msra.mxu0 0.0
    %247 = vmatpush.msra.mxu0 0.0
    %248 = vmatpush.msra.mxu0 0.0
    %249 = vmatpush.msra.mxu0 0.0
    %250 = vmatpush.msra.mxu0 0.0
    %251 = vmatpush.msra.mxu0 0.0
    %252 = vmatpush.msra.mxu0 0.0
    %253 = vmatpush.msra.mxu0 0.0
    %v254 = vand.u32 %v33, 4294901760
    %255 = vmatpush.msra.mxu0 %v254
    %v256 = vand.u32 %v32, 4294901760
    %257 = vmatpush.msra.mxu0 %v256
    %v258 = vand.u32 %v31, 4294901760
    %259 = vmatpush.msra.mxu0 %v258
    %v260 = vand.u32 %v30, 4294901760
    %261 = vmatpush.msra.mxu0 %v260
    %v262 = vand.u32 %v50, 4294901760
    %263 = vmatmul.f32.gmra.mxu0 %v262
    %v264 = vpop.f32.mrf.mxu0
    %v265 = vadd.f32 %v236, %v264
    %v266 = vand.u32 %v53, 4294901760
    %267 = vmatmul.f32.gmra.mxu0 %v266
    %v268 = vpop.f32.mrf.mxu0
    %v269 = vadd.f32 %v240, %v268
    %270 = vdwg.mxu0
    %271 = vst [vmem:[#allocation5] sm:$0xff] %v265
    %272 = vst [vmem:[#allocation5 + $0x8] sm:$0xff] %v269
    // Predicated region
    $region14: #{tpu_custom_call.1} parent=1 // pred_check
      _
    $region15: #{tpu_custom_call.1} parent=1 // pred_check_branch
      %274 = sbr.rel (0) target = $region17
    $region16: #{tpu_custom_call.1} parent=1 // pred_region
      %276 = vsyncadd [#allocation4], 0
      %s277 = sshll.u32 [#allocation5], 4
      %s278 = int_to_ptr.vmem [resolvable:$true] %s277
      %s279 = sshll.u32 %s2, 4
      %s280 = int_to_ptr.hbm [resolvable:$true] %s279
      %285 = dma.vmem_to_hbm [thread:$0]  %s278, 256, %s280, [#allocation4], 128, 128, 8
    $region17: #{tpu_custom_call.1} parent=1 // pred_fallthru
      _
    // Predicated region
    $region18: #{tpu_custom_call.1} parent=1 // pred_check
      _
    $region19: #{tpu_custom_call.1} parent=1 // pred_check_branch
      %287 = sbr.rel (0) target = $region21
    $region20: #{tpu_custom_call.1} parent=1 // pred_region
      %289 = dma.done [#allocation4], 256
    $region21: #{tpu_custom_call.1} parent=1 // pred_fallthru
      _
    %290 = vsyncpa [#allocation3], 1
    %291 = vsyncpa [#allocation4], 1

</llo_original>
